<compile_context>
chip_gen: v7x
topology: tpu7x:2x2x1
jax: 0.10.0
libtpu: 0.0.40
codegen_flags: <defaults>
</compile_context>

<pallas_src>
import functools

import jax
import jax.numpy as jnp
from jax.experimental import pallas as pl
from jax.experimental.pallas import tpu as pltpu

LANES = 128
ACC_SUBLANES = 8
TARGET_BLOCK_BYTES = 4 << 20   # ~4 MiB per input block (8192 f32 rows)


def _sublane_tile(dtype):
    # f32 -> 8, bf16/f16 -> 16, int8/fp8 -> 32 (sublane packing).
    itemsize = max(1, min(4, jnp.dtype(dtype).itemsize))
    return max(8, 32 // itemsize)


def _num_parallel_cores():
    # 2-wide parallel leading axis only where a JAX device has 2 TensorCores
    # (v7x, megacore v2/v3/v4/v5p).  v5e / v6e / *lite parts have 1 TC.
    try:
        kind = jax.devices()[0].device_kind.lower()
    except Exception:
        return 1
    if "lite" in kind or "v5e" in kind or "v6" in kind:
        return 1
    return 2


def _dice_partial_kernel(p_ref, t_ref, o_ref, inter_acc, sum_acc, *,
                         rows, block_rows, blocks_per_core,
                         first_masked_blk, needs_mask):
    c = pl.program_id(0)          # core / parallel slot
    s = pl.program_id(1)          # reduction step within this slot

    @pl.when(s == 0)
    def _():
        inter_acc[...] = jnp.zeros_like(inter_acc)
        sum_acc[...] = jnp.zeros_like(sum_acc)

    p = p_ref[...].astype(jnp.float32)
    t = t_ref[...].astype(jnp.float32)

    def accumulate(pv, tv):
        prod = tv * pv
        both = tv + pv
        if block_rows % ACC_SUBLANES == 0:
            # Cross-vreg VPU adds only; no per-step XLU sublane reduce, and the
            # scratch RMW is a full unmasked (8, 128) vreg op.
            inter_acc[...] += jnp.sum(
                prod.reshape(-1, ACC_SUBLANES, LANES), axis=0)
            sum_acc[...] += jnp.sum(
                both.reshape(-1, ACC_SUBLANES, LANES), axis=0)
        else:
            # Tiny single-block case (block_rows == rows < 8 or not /8).
            inter_acc[0:1, :] += jnp.sum(prod, axis=0, keepdims=True)
            sum_acc[0:1, :] += jnp.sum(both, axis=0, keepdims=True)

    if needs_mask:
        blk = c * blocks_per_core + s      # global (un-clamped) block id

        @pl.when(blk < first_masked_blk)
        def _():
            accumulate(p, t)

        @pl.when(blk >= first_masked_blk)
        def _():
            # Rows past `rows` (partial last block, or rows of a clamped
            # duplicate block) contribute zero.
            row_ids = (jax.lax.broadcasted_iota(jnp.int32, (block_rows, 1), 0)
                       + blk * block_rows)
            valid = row_ids < rows
            accumulate(jnp.where(valid, p, 0.0), jnp.where(valid, t, 0.0))
    else:
        accumulate(p, t)

    @pl.when(s == pl.num_programs(1) - 1)
    def _():
        o_ref[0] = inter_acc[...]
        o_ref[1] = sum_acc[...]


def dice_ratio_loss(y_pred, y_true):
    """Pallas equivalent of the PyTorch dice_ratio_loss.forward."""
    assert y_pred.shape == y_true.shape
    total = y_pred.size

    pf = jnp.reshape(y_pred, (-1,))
    tf = jnp.reshape(y_true, (-1,))

    rows = total // LANES
    rem = total - rows * LANES

    intersection = jnp.float32(0.0)
    sums = jnp.float32(0.0)

    if rows > 0:
        # Lane-aligned prefix goes through the kernel.  When the size is
        # already a lane multiple (common case) no slice is emitted at all.
        if rem:
            p_main, t_main = pf[:rows * LANES], tf[:rows * LANES]
        else:
            p_main, t_main = pf, tf
        p2 = p_main.reshape(rows, LANES)
        t2 = t_main.reshape(rows, LANES)

        itemsize_p = jnp.dtype(y_pred.dtype).itemsize
        itemsize_t = jnp.dtype(y_true.dtype).itemsize
        tile = max(_sublane_tile(y_pred.dtype), _sublane_tile(y_true.dtype))
        max_block_rows = TARGET_BLOCK_BYTES // (LANES * max(itemsize_p,
                                                            itemsize_t))
        max_block_rows = max(tile, (max_block_rows // tile) * tile)

        if rows <= max_block_rows:
            # Single block equal to the full array dim (always a legal block).
            block_rows = rows
        else:
            block_rows = max_block_rows

        num_blocks = (rows + block_rows - 1) // block_rows
        ncores = min(_num_parallel_cores(), num_blocks)
        blocks_per_core = (num_blocks + ncores - 1) // ncores
        grid = (ncores, blocks_per_core)

        row_tail = (num_blocks * block_rows != rows)
        dup_blocks = (blocks_per_core * ncores != num_blocks)
        needs_mask = row_tail or dup_blocks
        first_masked_blk = (num_blocks - 1) if row_tail else num_blocks

        def data_index_map(c, s):
            # Clamp so the DMA never starts past the end of the array; the
            # duplicated (clamped) blocks contribute zero via the row mask.
            return (jnp.minimum(c * blocks_per_core + s, num_blocks - 1), 0)

        kernel = functools.partial(
            _dice_partial_kernel,
            rows=rows,
            block_rows=block_rows,
            blocks_per_core=blocks_per_core,
            first_masked_blk=first_masked_blk,
            needs_mask=needs_mask)

        # Scoped VMEM: 2 inputs x 2 pipeline buffers + scratch + margin.
        block_bytes = block_rows * LANES * (itemsize_p + itemsize_t)
        vmem_needed = 2 * block_bytes + (2 << 20)
        vmem_limit = int(min(max(vmem_needed, 16 << 20), 40 << 20))

        in_bytes = rows * LANES * (itemsize_p + itemsize_t)
        partials = pl.pallas_call(
            kernel,
            out_shape=jax.ShapeDtypeStruct(
                (ncores, 2, ACC_SUBLANES, LANES), jnp.float32),
            grid_spec=pltpu.PrefetchScalarGridSpec(
                num_scalar_prefetch=0,
                grid=grid,
                in_specs=[
                    pl.BlockSpec((block_rows, LANES), data_index_map),
                    pl.BlockSpec((block_rows, LANES), data_index_map),
                ],
                out_specs=pl.BlockSpec((None, 2, ACC_SUBLANES, LANES),
                                       lambda c, s: (c, 0, 0, 0)),
                scratch_shapes=[
                    pltpu.VMEM((ACC_SUBLANES, LANES), jnp.float32),  # t*p
                    pltpu.VMEM((ACC_SUBLANES, LANES), jnp.float32),  # t+p
                ],
            ),
            compiler_params=pltpu.CompilerParams(
                dimension_semantics=("parallel", "arbitrary"),
                vmem_limit_bytes=vmem_limit),
            cost_estimate=pl.CostEstimate(
                flops=4 * rows * LANES,
                transcendentals=0,
                bytes_accessed=in_bytes
                + ncores * 2 * ACC_SUBLANES * LANES * 4),
        )(p2, t2)

        intersection = intersection + jnp.sum(partials[:, 0])
        sums = sums + jnp.sum(partials[:, 1])

    if rem:
        # <128-element tail: negligible; summed directly in the wrapper so the
        # kernel never needs a padded copy of the inputs.
        p_tail = pf[rows * LANES:].astype(jnp.float32)
        t_tail = tf[rows * LANES:].astype(jnp.float32)
        intersection = intersection + jnp.sum(t_tail * p_tail)
        sums = sums + jnp.sum(t_tail) + jnp.sum(p_tail)

    return 1.0 - (2.0 * intersection + 1.0) / (sums + 1.0)


def _reference(y_pred, y_true):
    pf = jnp.reshape(y_pred, (-1,)).astype(jnp.float32)
    tf = jnp.reshape(y_true, (-1,)).astype(jnp.float32)
    inter = jnp.sum(tf * pf)
    return 1.0 - (2.0 * inter + 1.0) / (jnp.sum(tf) + jnp.sum(pf) + 1.0)


if __name__ == "__main__":
    key = jax.random.PRNGKey(0)
    k1, k2 = jax.random.split(key)
    # Synthetic mask-like inputs, NCHW as in the PyTorch training script.
    y_pred = jax.nn.sigmoid(jax.random.normal(k1, (2, 4, 16, 16), jnp.float32))
    y_true = (jax.random.uniform(k2, (2, 4, 16, 16)) > 0.5).astype(jnp.float32)

    loss = jax.block_until_ready(dice_ratio_loss(y_pred, y_true))
    ref = jax.block_until_ready(_reference(y_pred, y_true))
    assert jnp.allclose(loss, ref, rtol=1e-5, atol=1e-6), (loss, ref)
    print("KERNEL_OK")
</pallas_src>

<mosaic_0001>
module attributes {stable_mosaic.version = 11 : i64} {
  func.func @_dice_partial_kernel(%arg0: i32, %arg1: i32, %arg2: memref<16x128xf32, #tpu.memory_space<vmem>>, %arg3: memref<16x128xf32, #tpu.memory_space<vmem>>, %arg4: memref<1x2x8x128xf32, #tpu.memory_space<vmem>>, %arg5: memref<8x128xf32, #tpu.memory_space<vmem>>, %arg6: memref<8x128xf32, #tpu.memory_space<vmem>>) attributes {dimension_semantics = [#tpu.dimension_semantics<parallel>, #tpu.dimension_semantics<arbitrary>], iteration_bounds = array<i64: 1, 1>, scalar_prefetch = 0 : i64, scratch_operands = 2 : i64, tpu.core_type = #tpu.core_type<tc>, window_params = [{transform_indices = @transform_0, window_bounds = array<i64: 16, 128>}, {transform_indices = @transform_1, window_bounds = array<i64: 16, 128>}, {transform_indices = @transform_2, window_bounds = array<i64: 1, 2, 8, 128>}]} {
    %c0_i32 = arith.constant 0 : i32
    %0 = arith.cmpi eq, %arg1, %c0_i32 : i32
    %1 = arith.extui %0 : i1 to i32
    %c0_i32_0 = arith.constant 0 : i32
    %2 = arith.cmpi ne, %1, %c0_i32_0 : i32
    scf.if %2 {
      %cst_15 = arith.constant 0.000000e+00 : f32
      %20 = vector.broadcast %cst_15 : f32 to vector<8x128xf32>
      %c0_16 = arith.constant 0 : index
      %c0_17 = arith.constant 0 : index
      %21 = vector.load %arg5[%c0_16, %c0_17] : memref<8x128xf32, #tpu.memory_space<vmem>>, vector<8x128xf32>
      tpu.vector_store %arg5[%c0_16, %c0_17], %20 {strides = array<i32>} : memref<8x128xf32, #tpu.memory_space<vmem>>, vector<8x128xf32>,
      %cst_18 = arith.constant 0.000000e+00 : f32
      %22 = vector.broadcast %cst_18 : f32 to vector<8x128xf32>
      %c0_19 = arith.constant 0 : index
      %c0_20 = arith.constant 0 : index
      %23 = vector.load %arg6[%c0_19, %c0_20] : memref<8x128xf32, #tpu.memory_space<vmem>>, vector<8x128xf32>
      tpu.vector_store %arg6[%c0_19, %c0_20], %22 {strides = array<i32>} : memref<8x128xf32, #tpu.memory_space<vmem>>, vector<8x128xf32>,
    } else {
    }
    %c0 = arith.constant 0 : index
    %c0_1 = arith.constant 0 : index
    %3 = vector.load %arg2[%c0, %c0_1] : memref<16x128xf32, #tpu.memory_space<vmem>>, vector<16x128xf32>
    %c0_2 = arith.constant 0 : index
    %c0_3 = arith.constant 0 : index
    %4 = vector.load %arg3[%c0_2, %c0_3] : memref<16x128xf32, #tpu.memory_space<vmem>>, vector<16x128xf32>
    %5 = arith.mulf %4, %3 : vector<16x128xf32>
    %6 = arith.addf %4, %3 : vector<16x128xf32>
    %c0_4 = arith.constant 0 : index
    %c0_5 = arith.constant 0 : index
    %7 = vector.load %arg5[%c0_4, %c0_5] : memref<8x128xf32, #tpu.memory_space<vmem>>, vector<8x128xf32>
    %8 = vector.shape_cast %5 : vector<16x128xf32> to vector<2x8x128xf32>
    %cst = arith.constant dense<0.000000e+00> : vector<8x128xf32>
    %9 = vector.multi_reduction <add>, %8, %cst [0] : vector<2x8x128xf32> to vector<8x128xf32>
    %10 = arith.addf %7, %9 : vector<8x128xf32>
    %c0_6 = arith.constant 0 : index
    %c0_7 = arith.constant 0 : index
    %11 = vector.load %arg5[%c0_6, %c0_7] : memref<8x128xf32, #tpu.memory_space<vmem>>, vector<8x128xf32>
    tpu.vector_store %arg5[%c0_6, %c0_7], %10 {strides = array<i32>} : memref<8x128xf32, #tpu.memory_space<vmem>>, vector<8x128xf32>,
    %c0_8 = arith.constant 0 : index
    %c0_9 = arith.constant 0 : index
    %12 = vector.load %arg6[%c0_8, %c0_9] : memref<8x128xf32, #tpu.memory_space<vmem>>, vector<8x128xf32>
    %13 = vector.shape_cast %6 : vector<16x128xf32> to vector<2x8x128xf32>
    %cst_10 = arith.constant dense<0.000000e+00> : vector<8x128xf32>
    %14 = vector.multi_reduction <add>, %13, %cst_10 [0] : vector<2x8x128xf32> to vector<8x128xf32>
    %15 = arith.addf %12, %14 : vector<8x128xf32>
    %c0_11 = arith.constant 0 : index
    %c0_12 = arith.constant 0 : index
    %16 = vector.load %arg6[%c0_11, %c0_12] : memref<8x128xf32, #tpu.memory_space<vmem>>, vector<8x128xf32>
    tpu.vector_store %arg6[%c0_11, %c0_12], %15 {strides = array<i32>} : memref<8x128xf32, #tpu.memory_space<vmem>>, vector<8x128xf32>,
    %c0_i32_13 = arith.constant 0 : i32
    %17 = arith.cmpi eq, %arg1, %c0_i32_13 : i32
    %18 = arith.extui %17 : i1 to i32
    %c0_i32_14 = arith.constant 0 : i32
    %19 = arith.cmpi ne, %18, %c0_i32_14 : i32
    scf.if %19 {
      %c0_15 = arith.constant 0 : index
      %c0_16 = arith.constant 0 : index
      %20 = vector.load %arg5[%c0_15, %c0_16] : memref<8x128xf32, #tpu.memory_space<vmem>>, vector<8x128xf32>
      %c0_17 = arith.constant 0 : index
      %c0_18 = arith.constant 0 : index
      %c0_19 = arith.constant 0 : index
      %c0_20 = arith.constant 0 : index
      %21 = vector.load %arg4[%c0_17, %c0_18, %c0_19, %c0_20] : memref<1x2x8x128xf32, #tpu.memory_space<vmem>>, vector<1x1x8x128xf32>
      %22 = vector.shape_cast %21 : vector<1x1x8x128xf32> to vector<8x128xf32>
      %23 = vector.shape_cast %20 : vector<8x128xf32> to vector<1x1x8x128xf32>
      tpu.vector_store %arg4[%c0_17, %c0_18, %c0_19, %c0_20], %23 {strides = array<i32>} : memref<1x2x8x128xf32, #tpu.memory_space<vmem>>, vector<1x1x8x128xf32>,
      %c0_21 = arith.constant 0 : index
      %c0_22 = arith.constant 0 : index
      %24 = vector.load %arg6[%c0_21, %c0_22] : memref<8x128xf32, #tpu.memory_space<vmem>>, vector<8x128xf32>
      %c0_23 = arith.constant 0 : index
      %c1 = arith.constant 1 : index
      %c0_24 = arith.constant 0 : index
      %c0_25 = arith.constant 0 : index
      %25 = vector.load %arg4[%c0_23, %c1, %c0_24, %c0_25] : memref<1x2x8x128xf32, #tpu.memory_space<vmem>>, vector<1x1x8x128xf32>
      %26 = vector.shape_cast %25 : vector<1x1x8x128xf32> to vector<8x128xf32>
      %27 = vector.shape_cast %24 : vector<8x128xf32> to vector<1x1x8x128xf32>
      tpu.vector_store %arg4[%c0_23, %c1, %c0_24, %c0_25], %27 {strides = array<i32>} : memref<1x2x8x128xf32, #tpu.memory_space<vmem>>, vector<1x1x8x128xf32>,
    } else {
    }
    return
  }
  func.func @transform_0(%arg0: i32, %arg1: i32) -> (i32, i32) {
    %c1_i32 = arith.constant 1 : i32
    %0 = arith.muli %arg0, %c1_i32 : i32
    %1 = arith.addi %0, %arg1 : i32
    %c0_i32 = arith.constant 0 : i32
    %2 = arith.minsi %1, %c0_i32 : i32
    %c0_i32_0 = arith.constant 0 : i32
    %c0_i32_1 = arith.constant 0 : i32
    return %2, %c0_i32_0 : i32, i32
  }
  func.func @transform_1(%arg0: i32, %arg1: i32) -> (i32, i32) {
    %c1_i32 = arith.constant 1 : i32
    %0 = arith.muli %arg0, %c1_i32 : i32
    %1 = arith.addi %0, %arg1 : i32
    %c0_i32 = arith.constant 0 : i32
    %2 = arith.minsi %1, %c0_i32 : i32
    %c0_i32_0 = arith.constant 0 : i32
    %c0_i32_1 = arith.constant 0 : i32
    return %2, %c0_i32_0 : i32, i32
  }
  func.func @transform_2(%arg0: i32, %arg1: i32) -> (i32, i32, i32, i32) {
    %c0_i32 = arith.constant 0 : i32
    %c0_i32_0 = arith.constant 0 : i32
    %c0_i32_1 = arith.constant 0 : i32
    %c0_i32_2 = arith.constant 0 : i32
    return %arg0, %c0_i32, %c0_i32_0, %c0_i32_1 : i32, i32, i32, i32
  }
}

</mosaic_0001>

<llo_original>
// kernel: tpu_custom_call.1
$region0: #{tpu_custom_call.1}
  #allocation0 [shape = 'u32[]', space=smem, size = 0x4, offset = 0x4, fixed_abs, tag = 'smem constant byte address 0x4 - core index']
  #allocation1 [shape = 'u32[144,128]{1,0:T(1,128)}', space=vmem, size = 0x12000, scoped, tag = 'internal scratch']
  #allocation2 [shape = 'f32[8,128]{1,0:T(8,128)}', space=vmem, size = 0x1000, scoped, tag = 'scratch operand']
  #allocation3 [shape = 'f32[8,128]{1,0:T(8,128)}', space=vmem, size = 0x1000, scoped, tag = 'scratch operand']
  %s0 = inlined_call_operand.hbm [shape: f32[16,128], index: 0, kind: input, shape index: {}]
  %s1 = inlined_call_operand.hbm [shape: f32[16,128], index: 1, kind: input, shape index: {}]
  %s2 = inlined_call_operand.hbm [shape: f32[1,2,8,128], index: 2, kind: output, shape index: {}]
  %s3 = sld [smem:[#allocation0]]
  $region34: #{tpu_custom_call.1} parent=0
    _
  %s5 = ssub.s32 1, %s3
  %s6 = scalar_select 0, %s5, %s3
  $region1: #{tpu_custom_call.1} parent=0
    #allocation4 [shape = 'u8[8192]{0}', space=vmem, size = 0x2000, scoped, tag = 'input window, operand 0, single buffered']
    #allocation5 [shape = 's32[1]{0}', space=sflag, size = 0x4, scoped, tag = 'scoped memory for tpu_custom_call.1']
    #allocation6 [shape = 's32[1]{0}', space=sflag, size = 0x4, scoped, tag = 'scoped memory for tpu_custom_call.1']
    #allocation7 [shape = 'u8[8192]{0}', space=vmem, size = 0x2000, scoped, tag = 'input window, operand 1, single buffered']
    #allocation8 [shape = 's32[1]{0}', space=sflag, size = 0x4, scoped, tag = 'scoped memory for tpu_custom_call.1']
    #allocation9 [shape = 'u8[8192]{0}', space=vmem, size = 0x2000, scoped, tag = 'output window, operand 0, single buffered']
    %7 = vsyncpa [#allocation5], 0
    %8 = vsyncpa [#allocation8], 0
    %9 = vsyncpa [#allocation6], 0
    // Predicated region
    $region2: #{tpu_custom_call.1} parent=1 // pred_check
      _
    $region3: #{tpu_custom_call.1} parent=1 // pred_check_branch
      %11 = sbr.rel (0) target = $region5
    $region4: #{tpu_custom_call.1} parent=1 // pred_region
      %s12 = sadd.s32 0, 0
      %p13 = scmp.lt.s32.totalorder %s12, 0
      %s14 = scalar_select %p13, %s12, 0
      %s15 = smul.u32 2, %s14
      %s17 = ssub.s32 256, 256
      %18 = vsyncadd [#allocation5], %s17
      %s19 = smul.addr %s15, 128
      %s20 = scalar_lea.hbm %s0, %s19
      %s21 = sshll.u32 [#allocation4], 4
      %s22 = int_to_ptr.vmem [resolvable:$true] %s21
      %27 = dma.hbm_to_vmem [thread:$0]  %s20, 256, %s22, [#allocation5], 128, 128, 8
    $region5: #{tpu_custom_call.1} parent=1 // pred_fallthru
      _
    // Predicated region
    $region6: #{tpu_custom_call.1} parent=1 // pred_check
      _
    $region7: #{tpu_custom_call.1} parent=1 // pred_check_branch
      %29 = sbr.rel (0) target = $region9
    $region8: #{tpu_custom_call.1} parent=1 // pred_region
      %s30 = sadd.s32 0, 0
      %p31 = scmp.lt.s32.totalorder %s30, 0
      %s32 = scalar_select %p31, %s30, 0
      %s33 = smul.u32 2, %s32
      %s35 = ssub.s32 256, 256
      %36 = vsyncadd [#allocation8], %s35
      %s37 = smul.addr %s33, 128
      %s38 = scalar_lea.hbm %s1, %s37
      %s39 = sshll.u32 [#allocation7], 4
      %s40 = int_to_ptr.vmem [resolvable:$true] %s39
      %45 = dma.hbm_to_vmem [thread:$0]  %s38, 256, %s40, [#allocation8], 128, 128, 8
    $region9: #{tpu_custom_call.1} parent=1 // pred_fallthru
      _
    // Predicated region
    $region10: #{tpu_custom_call.1} parent=1 // pred_check
      _
    $region11: #{tpu_custom_call.1} parent=1 // pred_check_branch
      %47 = sbr.rel (0) target = $region13
    $region12: #{tpu_custom_call.1} parent=1 // pred_region
      %48 = dma.done [#allocation5], 256
    $region13: #{tpu_custom_call.1} parent=1 // pred_fallthru
      _
    // Predicated region
    $region14: #{tpu_custom_call.1} parent=1 // pred_check
      _
    $region15: #{tpu_custom_call.1} parent=1 // pred_check_branch
      %50 = sbr.rel (0) target = $region17
    $region16: #{tpu_custom_call.1} parent=1 // pred_region
      %51 = dma.done [#allocation8], 256
    $region17: #{tpu_custom_call.1} parent=1 // pred_fallthru
      _
    %s52 = sadd.s32 0, 0
    %p53 = scmp.lt.s32.totalorder %s52, 0
    %s54 = scalar_select %p53, %s52, 0
    %s55 = smul.u32 2, %s54
    %s56 = sadd.s32 0, 0
    %p57 = scmp.lt.s32.totalorder %s56, 0
    %s58 = scalar_select %p57, %s56, 0
    %s59 = smul.u32 2, %s58
    %p60 = scmp.eq.s32.totalorder 0, 0
    // Predicated region
    $region18: #{tpu_custom_call.1} parent=1 // pred_check
      %p61 = pneg %p60
    $region19: #{tpu_custom_call.1} parent=1 // pred_check_branch
      %63 = sbr.rel (%p61) target = $region21
    $region20: #{tpu_custom_call.1} parent=1 // pred_region
      %64 = vst [vmem:[#allocation2] sm:$0xff] 0.0
      %65 = vst [vmem:[#allocation3] sm:$0xff] 0.0
    $region21: #{tpu_custom_call.1} parent=1 // pred_fallthru
      _
    %v66 = vld [vmem:[#allocation4] sm:$0xff]
    %v67 = vld [vmem:[#allocation4 + $0x8] sm:$0xff]
    %v68 = vld [vmem:[#allocation7] sm:$0xff]
    %v69 = vld [vmem:[#allocation7 + $0x8] sm:$0xff]
    %v70 = vmul.f32 %v68, %v66
    %v71 = vmul.f32 %v69, %v67
    %v72 = vadd.f32 %v68, %v66
    %v73 = vadd.f32 %v69, %v67
    %v74 = vld [vmem:[#allocation2] sm:$0xff]
    %v75 = vadd.f32 %v70, %v71
    %v76 = vadd.f32 %v74, %v75
    %77 = vst [vmem:[#allocation2] sm:$0xff] %v76
    %v78 = vld [vmem:[#allocation3] sm:$0xff]
    %v79 = vadd.f32 %v72, %v73
    %v80 = vadd.f32 %v78, %v79
    %81 = vst [vmem:[#allocation3] sm:$0xff] %v80
    // Predicated region
    $region22: #{tpu_custom_call.1} parent=1 // pred_check
      %p82 = pneg %p60
    $region23: #{tpu_custom_call.1} parent=1 // pred_check_branch
      %84 = sbr.rel (%p82) target = $region25
    $region24: #{tpu_custom_call.1} parent=1 // pred_region
      %v85 = vld [vmem:[#allocation2] sm:$0xff]
      %86 = vst [vmem:[#allocation9] sm:$0xff] %v85
      %v87 = vld [vmem:[#allocation3] sm:$0xff]
      %s88 = scalar_lea.vmem [#allocation9], 8
      %89 = vst [vmem:[%s88] sm:$0xff] %v87
    $region25: #{tpu_custom_call.1} parent=1 // pred_fallthru
      _
    // Predicated region
    $region26: #{tpu_custom_call.1} parent=1 // pred_check
      _
    $region27: #{tpu_custom_call.1} parent=1 // pred_check_branch
      %91 = sbr.rel (0) target = $region29
    $region28: #{tpu_custom_call.1} parent=1 // pred_region
      %s93 = ssub.s32 256, 256
      %94 = vsyncadd [#allocation6], %s93
      %s95 = sshll.u32 [#allocation9], 4
      %s96 = int_to_ptr.vmem [resolvable:$true] %s95
      %101 = dma.vmem_to_hbm [thread:$0]  %s96, 256, %s2, [#allocation6], 128, 128, 8
    $region29: #{tpu_custom_call.1} parent=1 // pred_fallthru
      _
    // Predicated region
    $region30: #{tpu_custom_call.1} parent=1 // pred_check
      _
    $region31: #{tpu_custom_call.1} parent=1 // pred_check_branch
      %103 = sbr.rel (0) target = $region33
    $region32: #{tpu_custom_call.1} parent=1 // pred_region
      %104 = dma.done [#allocation6], 256
    $region33: #{tpu_custom_call.1} parent=1 // pred_fallthru
      _
    %105 = vsyncpa [#allocation5], 1
    %106 = vsyncpa [#allocation8], 1
    %107 = vsyncpa [#allocation6], 1

</llo_original>
